<compile_context>
chip_gen: v7x
topology: tpu7x:2x2x1
jax: 0.10.0
libtpu: 0.0.40
codegen_flags: <defaults>
</compile_context>

<pallas_src>
import jax
import jax.numpy as jnp
from jax import lax
from jax.experimental import pallas as pl
from jax.experimental.pallas import tpu as pltpu


# ---------------------------------------------------------------------------
# One-time parameter packing (hoisted out of the per-call forward path)
# ---------------------------------------------------------------------------
def prepare_policy_params(trunk_params, mean_params, scale_params,
                          compute_dtype=jnp.bfloat16):
    """Packs PolicyModelStd params for the fused kernel.

    Each *_params is a list of (W, b) with W:(in, out), b:(out,).
    The mean/scale heads are fused into one stack: layer 0 concatenated along
    the output axis, deeper layers block-diagonal (zero padding is exact).
    """
    assert len(mean_params) == len(scale_params), (
        "head fusion requires equal layer counts "
        "(guaranteed by PolicyModelStd.__init__)")

    def pack_w(w):
        return jnp.asarray(w, jnp.float32).astype(compute_dtype)

    def pack_b(b):
        return jnp.asarray(b, jnp.float32).reshape(1, -1)

    trunk = [(pack_w(w), pack_b(b)) for w, b in trunk_params]

    head = []
    for i, ((wm, bm), (ws, bs)) in enumerate(zip(mean_params, scale_params)):
        wm = jnp.asarray(wm, jnp.float32)
        ws = jnp.asarray(ws, jnp.float32)
        if i == 0:
            # both heads consume the same trunk output -> concat outputs
            w = jnp.concatenate([wm, ws], axis=1)
        else:
            # block-diagonal [wm 0; 0 ws]
            w = jnp.zeros((wm.shape[0] + ws.shape[0],
                           wm.shape[1] + ws.shape[1]), jnp.float32)
            w = w.at[:wm.shape[0], :wm.shape[1]].set(wm)
            w = w.at[wm.shape[0]:, wm.shape[1]:].set(ws)
        b = jnp.concatenate([jnp.asarray(bm, jnp.float32).reshape(-1),
                             jnp.asarray(bs, jnp.float32).reshape(-1)])
        head.append((w.astype(compute_dtype), b.reshape(1, -1)))

    return dict(
        trunk=trunk,
        head=head,
        in_dim=int(trunk_params[0][0].shape[0]),
        mean_dim=int(mean_params[-1][0].shape[1]),
        scale_dim=int(scale_params[-1][0].shape[1]),
        compute_dtype=compute_dtype,
    )


# ---------------------------------------------------------------------------
# Kernel
# ---------------------------------------------------------------------------
def _make_kernel(n_trunk, n_head, mean_dim, activation, compute_dtype):
    """Kernel closure for a fixed (static) layer structure."""

    def kernel(*refs):
        # refs: [x, (W,b)*n_trunk, (W,b)*n_head, fused_out]
        x_ref = refs[0]
        idx = 1
        trunk, head = [], []
        for _ in range(n_trunk):
            trunk.append((refs[idx], refs[idx + 1]))
            idx += 2
        for _ in range(n_head):
            head.append((refs[idx], refs[idx + 1]))
            idx += 2
        out_ref = refs[idx]

        # trunk: activation after every layer except the last
        h = x_ref[...]
        for i, (w, b) in enumerate(trunk):
            h = jnp.dot(h, w[...], preferred_element_type=jnp.float32) + b[...]
            if i < n_trunk - 1:
                h = activation(h)
            h = h.astype(compute_dtype)

        # fused heads: y = [mean | scale_pre_exp]
        y = h
        for i, (w, b) in enumerate(head):
            y = jnp.dot(y, w[...], preferred_element_type=jnp.float32) + b[...]
            if i < n_head - 1:
                y = activation(y).astype(compute_dtype)

        # mean columns pass through, scale columns -> exp(.) + 1e-6 (EUP)
        col = lax.broadcasted_iota(jnp.int32, y.shape, dimension=1)
        out_ref[...] = jnp.where(col < mean_dim, y, jnp.exp(y) + 1e-6)

    return kernel


# ---------------------------------------------------------------------------
# Forward wrapper
# ---------------------------------------------------------------------------
def policy_model_std_forward(x, packed, *, activation=jnp.tanh,
                             block_batch=512):
    """PolicyModelStd.forward. Returns (mean, scale) like the PyTorch module."""
    trunk = packed["trunk"]
    head = packed["head"]
    in_dim = packed["in_dim"]
    mean_dim = packed["mean_dim"]
    scale_dim = packed["scale_dim"]
    cdt = packed["compute_dtype"]
    out_dim = mean_dim + scale_dim

    B = x.shape[0]
    x = x.astype(cdt)

    # Batch tile: multiple of the sublane pack for the compute dtype
    # (8 for f32, 16 for bf16); pad B up to a multiple of the tile.
    sub = max(8, 32 // jnp.dtype(cdt).itemsize)
    rounded_b = ((B + sub - 1) // sub) * sub
    tb = min(block_batch, rounded_b)
    b_pad = ((B + tb - 1) // tb) * tb
    if b_pad != B:
        x = jnp.pad(x, ((0, b_pad - B), (0, 0)))
    grid = (b_pad // tb,)

    flat = []
    for w, b in trunk + head:
        flat.append(w)
        flat.append(b)

    # x / output: tiled over batch; weights: full-extent, VMEM-resident.
    in_specs = [pl.BlockSpec((tb, in_dim), lambda i: (i, 0))]
    in_specs += [pl.BlockSpec(a.shape, lambda i: (0, 0)) for a in flat]
    out_specs = pl.BlockSpec((tb, out_dim), lambda i: (i, 0))

    # Advisory cost estimate (lets XLA overlap this small custom call).
    flops = sum(2 * b_pad * w.shape[0] * w.shape[1] for w, _ in trunk + head)
    trans = sum(b_pad * w.shape[1] for w, _ in (trunk[:-1] + head[:-1]))
    trans += b_pad * out_dim  # exp on the fused final output
    bytes_accessed = (x.size * x.dtype.itemsize
                      + sum(a.size * a.dtype.itemsize for a in flat)
                      + b_pad * out_dim * 4)
    cost = pl.CostEstimate(flops=flops, transcendentals=trans,
                           bytes_accessed=bytes_accessed)

    kernel = _make_kernel(len(trunk), len(head), mean_dim, activation, cdt)

    fused = pl.pallas_call(
        kernel,
        out_shape=jax.ShapeDtypeStruct((b_pad, out_dim), jnp.float32),
        grid=grid,
        in_specs=in_specs,
        out_specs=out_specs,
        compiler_params=pltpu.CompilerParams(
            dimension_semantics=("parallel",),      # megacore-shardable
            vmem_limit_bytes=32 * 1024 * 1024,      # safe on v5e/v6e/v7x
        ),
        cost_estimate=cost,
    )(x, *flat)

    mean = fused[:B, :mean_dim]
    scale = fused[:B, mean_dim:]
    return mean, scale


# ---------------------------------------------------------------------------
# Reference + init helpers (for the self-check)
# ---------------------------------------------------------------------------
def _init_linear(key, in_features, out_features):
    """Mimics torch.nn.Linear default init (uniform +-1/sqrt(in))."""
    kw, kb = jax.random.split(key)
    bound = 1.0 / jnp.sqrt(jnp.float32(in_features))
    w = jax.random.uniform(kw, (in_features, out_features), jnp.float32,
                           minval=-bound, maxval=bound)
    b = jax.random.uniform(kb, (out_features,), jnp.float32,
                           minval=-bound, maxval=bound)
    return w, b


def _init_stack(key, dims):
    keys = jax.random.split(key, len(dims) - 1)
    return [_init_linear(keys[i], dims[i], dims[i + 1])
            for i in range(len(dims) - 1)]


def _reference_forward(x, trunk_params, mean_params, scale_params,
                       activation=jnp.tanh):
    """Pure-JAX f32 reference of PolicyModelStd.forward."""
    h = x
    for i, (w, b) in enumerate(trunk_params):
        h = h @ w + b
        if i < len(trunk_params) - 1:
            h = activation(h)
    mean = h
    for i, (w, b) in enumerate(mean_params):
        mean = mean @ w + b
        if i < len(mean_params) - 1:
            mean = activation(mean)
    scale = h
    for i, (w, b) in enumerate(scale_params):
        scale = scale @ w + b
        if i < len(scale_params) - 1:
            scale = activation(scale)
    return mean, jnp.exp(scale) + 1e-6


if __name__ == "__main__":
    # PolicyModelStd(neurons, activation, mean_neurons, scale_neurons)
    # (mean_neurons[0]/scale_neurons[0] must equal neurons[-1], as in the
    #  PyTorch module for shapes to work.)
    neurons = [16, 64, 32]
    mean_neurons = [32, 32, 4]
    scale_neurons = [32, 32, 4]
    activation = jnp.tanh  # torch.tanh analogue

    key = jax.random.PRNGKey(0)
    k_x, k_t, k_m, k_s = jax.random.split(key, 4)

    trunk_params = _init_stack(k_t, neurons)
    mean_params = _init_stack(k_m, mean_neurons)
    scale_params = _init_stack(k_s, scale_neurons)

    batch = 64
    x = jax.random.normal(k_x, (batch, neurons[0]), jnp.float32)

    # Pack params once (bf16 weights, fused heads); per-call path has no
    # parameter casts/reshapes.
    packed = prepare_policy_params(trunk_params, mean_params, scale_params,
                                   compute_dtype=jnp.bfloat16)

    fwd = jax.jit(lambda xx: policy_model_std_forward(
        xx, packed, activation=activation, block_batch=512))

    mean, scale = fwd(x)
    jax.block_until_ready((mean, scale))

    mean_ref, scale_ref = _reference_forward(
        x, trunk_params, mean_params, scale_params, activation)

    assert mean.shape == (batch, mean_neurons[-1])
    assert scale.shape == (batch, scale_neurons[-1])
    # bf16 matmul path vs f32 reference -> relaxed tolerance
    assert jnp.allclose(mean, mean_ref, atol=5e-2, rtol=5e-2), (
        float(jnp.max(jnp.abs(mean - mean_ref))))
    assert jnp.allclose(scale, scale_ref, atol=5e-2, rtol=5e-2), (
        float(jnp.max(jnp.abs(scale - scale_ref))))
    assert bool(jnp.all(scale > 0.0))

    print("KERNEL_OK")
</pallas_src>

<mosaic_0001>
module attributes {stable_mosaic.version = 11 : i64} {
  func.func @kernel(%arg0: i32, %arg1: memref<64x16xbf16, #tpu.memory_space<vmem>>, %arg2: memref<16x64xbf16, #tpu.memory_space<vmem>>, %arg3: memref<1x64xf32, #tpu.memory_space<vmem>>, %arg4: memref<64x32xbf16, #tpu.memory_space<vmem>>, %arg5: memref<1x32xf32, #tpu.memory_space<vmem>>, %arg6: memref<32x64xbf16, #tpu.memory_space<vmem>>, %arg7: memref<1x64xf32, #tpu.memory_space<vmem>>, %arg8: memref<64x8xbf16, #tpu.memory_space<vmem>>, %arg9: memref<1x8xf32, #tpu.memory_space<vmem>>, %arg10: memref<64x8xf32, #tpu.memory_space<vmem>>) attributes {dimension_semantics = [#tpu.dimension_semantics<parallel>], iteration_bounds = array<i64: 1>, scalar_prefetch = 0 : i64, scratch_operands = 0 : i64, tpu.core_type = #tpu.core_type<tc>, window_params = [{transform_indices = @transform_0, window_bounds = array<i64: 64, 16>}, {pipeline_mode = #tpu.pipeline_mode<synchronous>, transform_indices = @transform_1, window_bounds = array<i64: 16, 64>}, {pipeline_mode = #tpu.pipeline_mode<synchronous>, transform_indices = @transform_2, window_bounds = array<i64: 1, 64>}, {pipeline_mode = #tpu.pipeline_mode<synchronous>, transform_indices = @transform_3, window_bounds = array<i64: 64, 32>}, {pipeline_mode = #tpu.pipeline_mode<synchronous>, transform_indices = @transform_4, window_bounds = array<i64: 1, 32>}, {pipeline_mode = #tpu.pipeline_mode<synchronous>, transform_indices = @transform_5, window_bounds = array<i64: 32, 64>}, {pipeline_mode = #tpu.pipeline_mode<synchronous>, transform_indices = @transform_6, window_bounds = array<i64: 1, 64>}, {pipeline_mode = #tpu.pipeline_mode<synchronous>, transform_indices = @transform_7, window_bounds = array<i64: 64, 8>}, {pipeline_mode = #tpu.pipeline_mode<synchronous>, transform_indices = @transform_8, window_bounds = array<i64: 1, 8>}, {transform_indices = @transform_9, window_bounds = array<i64: 64, 8>}]} {
    %c0 = arith.constant 0 : index
    %c0_0 = arith.constant 0 : index
    %0 = vector.load %arg1[%c0, %c0_0] : memref<64x16xbf16, #tpu.memory_space<vmem>>, vector<64x16xbf16>
    %c0_1 = arith.constant 0 : index
    %c0_2 = arith.constant 0 : index
    %1 = vector.load %arg2[%c0_1, %c0_2] : memref<16x64xbf16, #tpu.memory_space<vmem>>, vector<16x64xbf16>
    %cst = arith.constant dense<0.000000e+00> : vector<64x64xf32>
    %2 = tpu.matmul %0, %1, %cst {dimension_numbers = #tpu.dot_dimension_numbers<[1], [0], [0], [1], [0, 0, 1, 1], [], []>} : vector<64x16xbf16>, vector<16x64xbf16>, vector<64x64xf32> -> vector<64x64xf32>
    %c0_3 = arith.constant 0 : index
    %c0_4 = arith.constant 0 : index
    %3 = vector.load %arg3[%c0_3, %c0_4] : memref<1x64xf32, #tpu.memory_space<vmem>>, vector<1x64xf32>
    %4 = vector.broadcast %3 : vector<1x64xf32> to vector<64x64xf32>
    %5 = arith.addf %2, %4 : vector<64x64xf32>
    %6 = math.tanh %5 : vector<64x64xf32>
    %7 = arith.truncf %6 : vector<64x64xf32> to vector<64x64xbf16>
    %c0_5 = arith.constant 0 : index
    %c0_6 = arith.constant 0 : index
    %8 = vector.load %arg4[%c0_5, %c0_6] : memref<64x32xbf16, #tpu.memory_space<vmem>>, vector<64x32xbf16>
    %cst_7 = arith.constant dense<0.000000e+00> : vector<64x32xf32>
    %9 = tpu.matmul %7, %8, %cst_7 {dimension_numbers = #tpu.dot_dimension_numbers<[1], [0], [0], [1], [0, 0, 1, 1], [], []>} : vector<64x64xbf16>, vector<64x32xbf16>, vector<64x32xf32> -> vector<64x32xf32>
    %c0_8 = arith.constant 0 : index
    %c0_9 = arith.constant 0 : index
    %10 = vector.load %arg5[%c0_8, %c0_9] : memref<1x32xf32, #tpu.memory_space<vmem>>, vector<1x32xf32>
    %11 = vector.broadcast %10 : vector<1x32xf32> to vector<64x32xf32>
    %12 = arith.addf %9, %11 : vector<64x32xf32>
    %13 = arith.truncf %12 : vector<64x32xf32> to vector<64x32xbf16>
    %c0_10 = arith.constant 0 : index
    %c0_11 = arith.constant 0 : index
    %14 = vector.load %arg6[%c0_10, %c0_11] : memref<32x64xbf16, #tpu.memory_space<vmem>>, vector<32x64xbf16>
    %cst_12 = arith.constant dense<0.000000e+00> : vector<64x64xf32>
    %15 = tpu.matmul %13, %14, %cst_12 {dimension_numbers = #tpu.dot_dimension_numbers<[1], [0], [0], [1], [0, 0, 1, 1], [], []>} : vector<64x32xbf16>, vector<32x64xbf16>, vector<64x64xf32> -> vector<64x64xf32>
    %c0_13 = arith.constant 0 : index
    %c0_14 = arith.constant 0 : index
    %16 = vector.load %arg7[%c0_13, %c0_14] : memref<1x64xf32, #tpu.memory_space<vmem>>, vector<1x64xf32>
    %17 = vector.broadcast %16 : vector<1x64xf32> to vector<64x64xf32>
    %18 = arith.addf %15, %17 : vector<64x64xf32>
    %19 = math.tanh %18 : vector<64x64xf32>
    %20 = arith.truncf %19 : vector<64x64xf32> to vector<64x64xbf16>
    %c0_15 = arith.constant 0 : index
    %c0_16 = arith.constant 0 : index
    %21 = vector.load %arg8[%c0_15, %c0_16] : memref<64x8xbf16, #tpu.memory_space<vmem>>, vector<64x8xbf16>
    %cst_17 = arith.constant dense<0.000000e+00> : vector<64x8xf32>
    %22 = tpu.matmul %20, %21, %cst_17 {dimension_numbers = #tpu.dot_dimension_numbers<[1], [0], [0], [1], [0, 0, 1, 1], [], []>} : vector<64x64xbf16>, vector<64x8xbf16>, vector<64x8xf32> -> vector<64x8xf32>
    %c0_18 = arith.constant 0 : index
    %c0_19 = arith.constant 0 : index
    %23 = vector.load %arg9[%c0_18, %c0_19] : memref<1x8xf32, #tpu.memory_space<vmem>>, vector<1x8xf32>
    %24 = vector.broadcast %23 : vector<1x8xf32> to vector<64x8xf32>
    %25 = arith.addf %22, %24 : vector<64x8xf32>
    %26 = tpu.iota {dimensions = array<i32: 1>} : vector<64x8xi32>
    %c4_i32 = arith.constant 4 : i32
    %27 = vector.broadcast %c4_i32 : i32 to vector<64x8xi32>
    %28 = arith.cmpi slt, %26, %27 : vector<64x8xi32>
    %29 = math.exp %25 : vector<64x8xf32>
    %cst_20 = arith.constant 9.99999997E-7 : f32
    %30 = vector.broadcast %cst_20 : f32 to vector<64x8xf32>
    %31 = arith.addf %29, %30 : vector<64x8xf32>
    %32 = arith.select %28, %25, %31 : vector<64x8xi1>, vector<64x8xf32>
    %c0_21 = arith.constant 0 : index
    %c0_22 = arith.constant 0 : index
    %33 = vector.load %arg10[%c0_21, %c0_22] : memref<64x8xf32, #tpu.memory_space<vmem>>, vector<64x8xf32>
    tpu.vector_store %arg10[%c0_21, %c0_22], %32 {strides = array<i32>} : memref<64x8xf32, #tpu.memory_space<vmem>>, vector<64x8xf32>,
    return
  }
  func.func @transform_0(%arg0: i32) -> (i32, i32) {
    %c0_i32 = arith.constant 0 : i32
    %c0_i32_0 = arith.constant 0 : i32
    return %arg0, %c0_i32 : i32, i32
  }
  func.func @transform_1(%arg0: i32) -> (i32, i32) {
    %c0_i32 = arith.constant 0 : i32
    %c0_i32_0 = arith.constant 0 : i32
    %c0_i32_1 = arith.constant 0 : i32
    return %c0_i32, %c0_i32_0 : i32, i32
  }
  func.func @transform_2(%arg0: i32) -> (i32, i32) {
    %c0_i32 = arith.constant 0 : i32
    %c0_i32_0 = arith.constant 0 : i32
    %c0_i32_1 = arith.constant 0 : i32
    return %c0_i32, %c0_i32_0 : i32, i32
  }
  func.func @transform_3(%arg0: i32) -> (i32, i32) {
    %c0_i32 = arith.constant 0 : i32
    %c0_i32_0 = arith.constant 0 : i32
    %c0_i32_1 = arith.constant 0 : i32
    return %c0_i32, %c0_i32_0 : i32, i32
  }
  func.func @transform_4(%arg0: i32) -> (i32, i32) {
    %c0_i32 = arith.constant 0 : i32
    %c0_i32_0 = arith.constant 0 : i32
    %c0_i32_1 = arith.constant 0 : i32
    return %c0_i32, %c0_i32_0 : i32, i32
  }
  func.func @transform_5(%arg0: i32) -> (i32, i32) {
    %c0_i32 = arith.constant 0 : i32
    %c0_i32_0 = arith.constant 0 : i32
    %c0_i32_1 = arith.constant 0 : i32
    return %c0_i32, %c0_i32_0 : i32, i32
  }
  func.func @transform_6(%arg0: i32) -> (i32, i32) {
    %c0_i32 = arith.constant 0 : i32
    %c0_i32_0 = arith.constant 0 : i32
    %c0_i32_1 = arith.constant 0 : i32
    return %c0_i32, %c0_i32_0 : i32, i32
  }
  func.func @transform_7(%arg0: i32) -> (i32, i32) {
    %c0_i32 = arith.constant 0 : i32
    %c0_i32_0 = arith.constant 0 : i32
    %c0_i32_1 = arith.constant 0 : i32
    return %c0_i32, %c0_i32_0 : i32, i32
  }
  func.func @transform_8(%arg0: i32) -> (i32, i32) {
    %c0_i32 = arith.constant 0 : i32
    %c0_i32_0 = arith.constant 0 : i32
    %c0_i32_1 = arith.constant 0 : i32
    return %c0_i32, %c0_i32_0 : i32, i32
  }
  func.func @transform_9(%arg0: i32) -> (i32, i32) {
    %c0_i32 = arith.constant 0 : i32
    %c0_i32_0 = arith.constant 0 : i32
    return %arg0, %c0_i32 : i32, i32
  }
}

</mosaic_0001>

<llo_original>
// kernel: _lambda_.1
$region0: #{_lambda_.1}
  #allocation0 [shape = 'u32[]', space=smem, size = 0x4, offset = 0x4, fixed_abs, tag = 'smem constant byte address 0x4 - core index']
  #allocation1 [shape = 'u32[144,128]{1,0:T(1,128)}', space=vmem, size = 0x12000, scoped, tag = 'internal scratch']
  %s0 = inlined_call_operand.vmem [shape: bf16[64,16], index: 0, kind: input, shape index: {}]
  %s1 = inlined_call_operand.vmem [shape: bf16[16,64], index: 1, kind: input, shape index: {}]
  %s2 = inlined_call_operand.hbm [shape: f32[1,64], index: 2, kind: input, shape index: {}]
  %s3 = inlined_call_operand.vmem [shape: bf16[64,32], index: 3, kind: input, shape index: {}]
  %s4 = inlined_call_operand.hbm [shape: f32[1,32], index: 4, kind: input, shape index: {}]
  %s5 = inlined_call_operand.vmem [shape: bf16[32,64], index: 5, kind: input, shape index: {}]
  %s6 = inlined_call_operand.vmem [shape: f32[1,64], index: 6, kind: input, shape index: {}]
  %s7 = inlined_call_operand.vmem [shape: bf16[64,8], index: 7, kind: input, shape index: {}]
  %s8 = inlined_call_operand.vmem [shape: f32[1,8], index: 8, kind: input, shape index: {}]
  %s9 = inlined_call_operand.vmem [shape: f32[64,8], index: 9, kind: output, shape index: {}]
  %s10 = sld [smem:[#allocation0]]
  $region54: #{_lambda_.1} parent=0
    _
  %s12 = ssub.s32 1, %s10
  %s13 = scalar_select 0, %s12, %s10
  $region1: #{_lambda_.1} parent=0
    #allocation2 [shape = 'u8[512]{0}', space=vmem, size = 0x400, scoped, tag = 'input window, operand 2, single buffered']
    #allocation3 [shape = 's32[1]{0}', space=sflag, size = 0x4, scoped, tag = 'scoped memory for _lambda_.1']
    #allocation4 [shape = 'u8[512]{0}', space=vmem, size = 0x400, scoped, tag = 'input window, operand 4, single buffered']
    #allocation5 [shape = 's32[1]{0}', space=sflag, size = 0x4, scoped, tag = 'scoped memory for _lambda_.1']
    %14 = vsyncpa [#allocation3], 0
    %15 = vsyncpa [#allocation5], 0
    // Predicated region
    $region2: #{_lambda_.1} parent=1 // pred_check
      _
    $region3: #{_lambda_.1} parent=1 // pred_check_branch
      %17 = sbr.rel (0) target = $region5
    $region4: #{_lambda_.1} parent=1 // pred_region
      _
    $region5: #{_lambda_.1} parent=1 // pred_fallthru
      _
    // Predicated region
    $region6: #{_lambda_.1} parent=1 // pred_check
      _
    $region7: #{_lambda_.1} parent=1 // pred_check_branch
      %19 = sbr.rel (0) target = $region9
    $region8: #{_lambda_.1} parent=1 // pred_region
      _
    $region9: #{_lambda_.1} parent=1 // pred_fallthru
      _
    // Predicated region
    $region10: #{_lambda_.1} parent=1 // pred_check
      _
    $region11: #{_lambda_.1} parent=1 // pred_check_branch
      %21 = sbr.rel (0) target = $region13
    $region12: #{_lambda_.1} parent=1 // pred_region
      %s23 = ssub.s32 16, 16
      %24 = vsyncadd [#allocation3], %s23
      %s26 = sshll.u32 [#allocation2], 4
      %s27 = int_to_ptr.vmem [resolvable:$true] %s26
      %29 = dma.hbm_to_vmem [thread:$0]  %s2, 16, %s27, [#allocation3]
    $region13: #{_lambda_.1} parent=1 // pred_fallthru
      _
    // Predicated region
    $region14: #{_lambda_.1} parent=1 // pred_check
      _
    $region15: #{_lambda_.1} parent=1 // pred_check_branch
      %31 = sbr.rel (0) target = $region17
    $region16: #{_lambda_.1} parent=1 // pred_region
      _
    $region17: #{_lambda_.1} parent=1 // pred_fallthru
      _
    // Predicated region
    $region18: #{_lambda_.1} parent=1 // pred_check
      _
    $region19: #{_lambda_.1} parent=1 // pred_check_branch
      %33 = sbr.rel (0) target = $region21
    $region20: #{_lambda_.1} parent=1 // pred_region
      %s35 = ssub.s32 16, 16
      %36 = vsyncadd [#allocation5], %s35
      %s38 = sshll.u32 [#allocation4], 4
      %s39 = int_to_ptr.vmem [resolvable:$true] %s38
      %41 = dma.hbm_to_vmem [thread:$0]  %s4, 16, %s39, [#allocation5]
    $region21: #{_lambda_.1} parent=1 // pred_fallthru
      _
    // Predicated region
    $region22: #{_lambda_.1} parent=1 // pred_check
      _
    $region23: #{_lambda_.1} parent=1 // pred_check_branch
      %43 = sbr.rel (0) target = $region25
    $region24: #{_lambda_.1} parent=1 // pred_region
      _
    $region25: #{_lambda_.1} parent=1 // pred_fallthru
      _
    // Predicated region
    $region26: #{_lambda_.1} parent=1 // pred_check
      _
    $region27: #{_lambda_.1} parent=1 // pred_check_branch
      %45 = sbr.rel (0) target = $region29
    $region28: #{_lambda_.1} parent=1 // pred_region
      _
    $region29: #{_lambda_.1} parent=1 // pred_fallthru
      _
    // Predicated region
    $region30: #{_lambda_.1} parent=1 // pred_check
      _
    $region31: #{_lambda_.1} parent=1 // pred_check_branch
      %47 = sbr.rel (0) target = $region33
    $region32: #{_lambda_.1} parent=1 // pred_region
      _
    $region33: #{_lambda_.1} parent=1 // pred_fallthru
      _
    // Predicated region
    $region34: #{_lambda_.1} parent=1 // pred_check
      _
    $region35: #{_lambda_.1} parent=1 // pred_check_branch
      %49 = sbr.rel (0) target = $region37
    $region36: #{_lambda_.1} parent=1 // pred_region
      _
    $region37: #{_lambda_.1} parent=1 // pred_fallthru
      _
    // Predicated region
    $region38: #{_lambda_.1} parent=1 // pred_check
      _
    $region39: #{_lambda_.1} parent=1 // pred_check_branch
      %51 = sbr.rel (0) target = $region41
    $region40: #{_lambda_.1} parent=1 // pred_region
      %52 = dma.done [#allocation3], 16
    $region41: #{_lambda_.1} parent=1 // pred_fallthru
      _
    // Predicated region
    $region42: #{_lambda_.1} parent=1 // pred_check
      _
    $region43: #{_lambda_.1} parent=1 // pred_check_branch
      %54 = sbr.rel (0) target = $region45
    $region44: #{_lambda_.1} parent=1 // pred_region
      %55 = dma.done [#allocation5], 16
    $region45: #{_lambda_.1} parent=1 // pred_fallthru
      _
    %v57 = vld [vmem:[%s0] sm:$0xf]
    %v58 = vld [vmem:[%s0 + $0x4] sm:$0xf]
    %v59 = vld [vmem:[%s0 + $0x8] sm:$0xf]
    %v60 = vld [vmem:[%s0 + $0xc] sm:$0xf]
    %v61 = vld [vmem:[%s0 + $0x10] sm:$0xf]
    %v62 = vld [vmem:[%s0 + $0x14] sm:$0xf]
    %v63 = vld [vmem:[%s0 + $0x18] sm:$0xf]
    %v64 = vld [vmem:[%s0 + $0x1c] sm:$0xf]
    %v65 = vld [vmem:[%s1] sm:$0xf]
    %v66 = vld [vmem:[%s1 + $0x4] sm:$0xf]
    %v67 = vld [vmem:[#allocation2] sm:$0x1]
    %v69 = vlaneseq
    %v70 = vshrl.u32 %v69, 7
    %v71 = vsub.s32 0, %v70
    %v72 = vrot.slane %v67, %v71
    %v82 = vunpack.c.l.b16 %v57
    %v83 = vunpack.c.l.b16 %v58
    %v84 = vunpack.c.l.b16 %v59
    %v85 = vunpack.c.l.b16 %v60
    %v86 = vunpack.c.l.b16 %v61
    %v87 = vunpack.c.l.b16 %v62
    %v88 = vunpack.c.l.b16 %v63
    %v89 = vunpack.c.l.b16 %v64
    %v90 = vpack.c.b16 %v83, %v82
    %v91 = vpack.c.b16 %v85, %v84
    %v92 = vpack.c.b16 %v87, %v86
    %v93 = vpack.c.b16 %v89, %v88
    %v96 = vunpack.c.l.b16 %v65
    %v97 = vunpack.c.l.b16 %v66
    %v98 = vpack.c.b16 %v97, %v96
    %vm100 = vcmask 130048
    %v102 = vsel %vm100, %v90, 0
    %v105 = vsel %vm100, %v91, 0
    %v108 = vsel %vm100, %v92, 0
    %v111 = vsel %vm100, %v93, 0
    %113 = vmatprep.subr.bf16.mxu0 0
    %114 = vmatpush1.bf16.msra.mxu0 %v98
    %115 = vmatprep.subr.bf16.mxu0 0
    %116 = vmatpush1.bf16.msra.mxu0 0
    %117 = vmatprep.subr.bf16.mxu0 0
    %118 = vmatpush1.bf16.msra.mxu0 0
    %119 = vmatprep.subr.bf16.mxu0 0
    %120 = vmatpush1.bf16.msra.mxu0 0
    %121 = vmatprep.subr.bf16.mxu0 0
    %122 = vmatpush1.bf16.msra.mxu0 0
    %123 = vmatprep.subr.bf16.mxu0 0
    %124 = vmatpush1.bf16.msra.mxu0 0
    %125 = vmatprep.subr.bf16.mxu0 0
    %126 = vmatpush1.bf16.msra.mxu0 0
    %127 = vmatprep.subr.bf16.mxu0 0
    %128 = vmatpush1.bf16.msra.mxu0 0
    %129 = vmatprep.subr.bf16.mxu0 0
    %130 = vmatpush1.bf16.msra.mxu0 0
    %131 = vmatprep.subr.bf16.mxu0 0
    %132 = vmatpush1.bf16.msra.mxu0 0
    %133 = vmatprep.subr.bf16.mxu0 0
    %134 = vmatpush1.bf16.msra.mxu0 0
    %135 = vmatprep.subr.bf16.mxu0 0
    %136 = vmatpush1.bf16.msra.mxu0 0
    %137 = vmatprep.subr.bf16.mxu0 0
    %138 = vmatpush1.bf16.msra.mxu0 0
    %139 = vmatprep.subr.bf16.mxu0 0
    %140 = vmatpush1.bf16.msra.mxu0 0
    %141 = vmatprep.subr.bf16.mxu0 0
    %142 = vmatpush1.bf16.msra.mxu0 0
    %143 = vmatprep.subr.bf16.mxu0 0
    %144 = vmatpush1.bf16.msra.mxu0 0
    %145 = vmatprep.mubr.bf16.mxu0 0
    %146 = vmatmul.mubr.bf16.gmra.mrb[0].mxu0 %v102
    %v147 = vpop.f32.mrb[0].mxu0
    %v148 = vadd.f32 %v72, %v147
    %v149 = vpop.f32.mrb[0].mxu0
    %v150 = vpop.f32.mrb[0].mxu0
    %v151 = vadd.f32 %v72, %v150
    %v152 = vpop.f32.mrb[0].mxu0
    %153 = vmatprep.mubr.bf16.mxu0 0
    %154 = vmatmul.mubr.bf16.gmra.mrb[0].mxu0 %v105
    %v155 = vpop.f32.mrb[0].mxu0
    %v156 = vadd.f32 %v72, %v155
    %v157 = vpop.f32.mrb[0].mxu0
    %v158 = vpop.f32.mrb[0].mxu0
    %v159 = vadd.f32 %v72, %v158
    %v160 = vpop.f32.mrb[0].mxu0
    %161 = vmatprep.mubr.bf16.mxu0 0
    %162 = vmatmul.mubr.bf16.gmra.mrb[0].mxu0 %v108
    %v163 = vpop.f32.mrb[0].mxu0
    %v164 = vadd.f32 %v72, %v163
    %v165 = vpop.f32.mrb[0].mxu0
    %v166 = vpop.f32.mrb[0].mxu0
    %v167 = vadd.f32 %v72, %v166
    %v168 = vpop.f32.mrb[0].mxu0
    %169 = vmatprep.mubr.bf16.mxu0 0
    %170 = vmatmul.mubr.bf16.gmra.mrb[0].mxu0 %v111
    %v171 = vpop.f32.mrb[0].mxu0
    %v172 = vadd.f32 %v72, %v171
    %v173 = vpop.f32.mrb[0].mxu0
    %v174 = vpop.f32.mrb[0].mxu0
    %v175 = vadd.f32 %v72, %v174
    %v176 = vpop.f32.mrb[0].mxu0
    %177 = vdwg.mxu0
    %v178 = vtanh.pop %v148
    %v179 = vtanh.pop %v151
    %v180 = vtanh.pop %v156
    %v181 = vtanh.pop %v159
    %v182 = vtanh.pop %v164
    %v183 = vtanh.pop %v167
    %v184 = vtanh.pop %v172
    %v185 = vtanh.pop %v175
    %v186 = vpack.c.bf16 %v179, %v178
    %v187 = vpack.c.bf16 %v181, %v180
    %v188 = vpack.c.bf16 %v183, %v182
    %v189 = vpack.c.bf16 %v185, %v184
    %v190 = vld [vmem:[%s3] sm:$0xf]
    %v191 = vld [vmem:[%s3 + $0x4] sm:$0xf]
    %v192 = vld [vmem:[%s3 + $0x8] sm:$0xf]
    %v193 = vld [vmem:[%s3 + $0xc] sm:$0xf]
    %v194 = vld [vmem:[%s3 + $0x10] sm:$0xf]
    %v195 = vld [vmem:[%s3 + $0x14] sm:$0xf]
    %v196 = vld [vmem:[%s3 + $0x18] sm:$0xf]
    %v197 = vld [vmem:[%s3 + $0x1c] sm:$0xf]
    %v198 = vld [vmem:[#allocation4] sm:$0x1]
    %v200 = vlaneseq
    %v201 = vshrl.u32 %v200, 7
    %v202 = vsub.s32 0, %v201
    %v203 = vrot.slane %v198, %v202
    %v213 = vunpack.c.l.b16 %v190
    %v214 = vunpack.c.l.b16 %v191
    %v215 = vunpack.c.l.b16 %v192
    %v216 = vunpack.c.l.b16 %v193
    %v217 = vunpack.c.l.b16 %v194
    %v218 = vunpack.c.l.b16 %v195
    %v219 = vunpack.c.l.b16 %v196
    %v220 = vunpack.c.l.b16 %v197
    %v221 = vpack.c.b16 %v214, %v213
    %v222 = vpack.c.b16 %v216, %v215
    %v223 = vpack.c.b16 %v218, %v217
    %v224 = vpack.c.b16 %v220, %v219
    %vm229 = vcmask 523264
    %v231 = vsel %vm229, %v186, 0
    %v234 = vsel %vm229, %v187, 0
    %v237 = vsel %vm229, %v188, 0
    %v240 = vsel %vm229, %v189, 0
    %242 = vmatprep.subr.bf16.mxu0 0
    %243 = vmatpush1.bf16.msra.mxu0 %v221
    %244 = vmatprep.subr.bf16.mxu0 0
    %245 = vmatpush1.bf16.msra.mxu0 %v222
    %246 = vmatprep.subr.bf16.mxu0 0
    %247 = vmatpush1.bf16.msra.mxu0 %v223
    %248 = vmatprep.subr.bf16.mxu0 0
    %249 = vmatpush1.bf16.msra.mxu0 %v224
    %250 = vmatprep.subr.bf16.mxu0 0
    %251 = vmatpush1.bf16.msra.mxu0 0
    %252 = vmatprep.subr.bf16.mxu0 0
    %253 = vmatpush1.bf16.msra.mxu0 0
    %254 = vmatprep.subr.bf16.mxu0 0
    %255 = vmatpush1.bf16.msra.mxu0 0
    %256 = vmatprep.subr.bf16.mxu0 0
    %257 = vmatpush1.bf16.msra.mxu0 0
    %258 = vmatprep.subr.bf16.mxu0 0
    %259 = vmatpush1.bf16.msra.mxu0 0
    %260 = vmatprep.subr.bf16.mxu0 0
    %261 = vmatpush1.bf16.msra.mxu0 0
    %262 = vmatprep.subr.bf16.mxu0 0
    %263 = vmatpush1.bf16.msra.mxu0 0
    %264 = vmatprep.subr.bf16.mxu0 0
    %265 = vmatpush1.bf16.msra.mxu0 0
    %266 = vmatprep.subr.bf16.mxu0 0
    %267 = vmatpush1.bf16.msra.mxu0 0
    %268 = vmatprep.subr.bf16.mxu0 0
    %269 = vmatpush1.bf16.msra.mxu0 0
    %270 = vmatprep.subr.bf16.mxu0 0
    %271 = vmatpush1.bf16.msra.mxu0 0
    %272 = vmatprep.subr.bf16.mxu0 0
    %273 = vmatpush1.bf16.msra.mxu0 0
    %274 = vmatprep.mubr.bf16.mxu0 0
    %275 = vmatmul.mubr.bf16.gmra.mrb[0].mxu0 %v231
    %v276 = vpop.f32.mrb[0].mxu0
    %v277 = vadd.f32 %v203, %v276
    %v278 = vpop.f32.mrb[0].mxu0
    %v279 = vpop.f32.mrb[0].mxu0
    %v280 = vadd.f32 %v203, %v279
    %v281 = vpop.f32.mrb[0].mxu0
    %282 = vmatprep.mubr.bf16.mxu0 0
    %283 = vmatmul.mubr.bf16.gmra.mrb[0].mxu0 %v234
    %v284 = vpop.f32.mrb[0].mxu0
    %v285 = vadd.f32 %v203, %v284
    %v286 = vpop.f32.mrb[0].mxu0
    %v287 = vpop.f32.mrb[0].mxu0
    %v288 = vadd.f32 %v203, %v287
    %v289 = vpop.f32.mrb[0].mxu0
    %290 = vmatprep.mubr.bf16.mxu0 0
    %291 = vmatmul.mubr.bf16.gmra.mrb[0].mxu0 %v237
    %v292 = vpop.f32.mrb[0].mxu0
    %v293 = vadd.f32 %v203, %v292
    %v294 = vpop.f32.mrb[0].mxu0
    %v295 = vpop.f32.mrb[0].mxu0
    %v296 = vadd.f32 %v203, %v295
    %v297 = vpop.f32.mrb[0].mxu0
    %298 = vmatprep.mubr.bf16.mxu0 0
    %299 = vmatmul.mubr.bf16.gmra.mrb[0].mxu0 %v240
    %v300 = vpop.f32.mrb[0].mxu0
    %v301 = vadd.f32 %v203, %v300
    %v302 = vpop.f32.mrb[0].mxu0
    %v303 = vpop.f32.mrb[0].mxu0
    %v304 = vadd.f32 %v203, %v303
    %v305 = vpop.f32.mrb[0].mxu0
    %306 = vdwg.mxu0
    %v307 = vpack.c.bf16 %v280, %v277
    %v308 = vpack.c.bf16 %v288, %v285
    %v309 = vpack.c.bf16 %v296, %v293
    %v310 = vpack.c.bf16 %v304, %v301
    %v311 = vld [vmem:[%s5] sm:$0xf]
    %v312 = vld [vmem:[%s5 + $0x4] sm:$0xf]
    %v313 = vld [vmem:[%s5 + $0x8] sm:$0xf]
    %v314 = vld [vmem:[%s5 + $0xc] sm:$0xf]
    %v315 = vld [vmem:[%s6] sm:$0x1]
    %v317 = vlaneseq
    %v318 = vshrl.u32 %v317, 7
    %v319 = vsub.s32 0, %v318
    %v320 = vrot.slane %v315, %v319
    %v326 = vunpack.c.l.b16 %v311
    %v327 = vunpack.c.l.b16 %v312
    %v328 = vunpack.c.l.b16 %v313
    %v329 = vunpack.c.l.b16 %v314
    %v330 = vpack.c.b16 %v327, %v326
    %v331 = vpack.c.b16 %v329, %v328
    %vm334 = vcmask 261120
    %v336 = vsel %vm334, %v307, 0
    %v339 = vsel %vm334, %v308, 0
    %v342 = vsel %vm334, %v309, 0
    %v345 = vsel %vm334, %v310, 0
    %347 = vmatprep.subr.bf16.mxu0 0
    %348 = vmatpush1.bf16.msra.mxu0 %v330
    %349 = vmatprep.subr.bf16.mxu0 0
    %350 = vmatpush1.bf16.msra.mxu0 %v331
    %351 = vmatprep.subr.bf16.mxu0 0
    %352 = vmatpush1.bf16.msra.mxu0 0
    %353 = vmatprep.subr.bf16.mxu0 0
    %354 = vmatpush1.bf16.msra.mxu0 0
    %355 = vmatprep.subr.bf16.mxu0 0
    %356 = vmatpush1.bf16.msra.mxu0 0
    %357 = vmatprep.subr.bf16.mxu0 0
    %358 = vmatpush1.bf16.msra.mxu0 0
    %359 = vmatprep.subr.bf16.mxu0 0
    %360 = vmatpush1.bf16.msra.mxu0 0
    %361 = vmatprep.subr.bf16.mxu0 0
    %362 = vmatpush1.bf16.msra.mxu0 0
    %363 = vmatprep.subr.bf16.mxu0 0
    %364 = vmatpush1.bf16.msra.mxu0 0
    %365 = vmatprep.subr.bf16.mxu0 0
    %366 = vmatpush1.bf16.msra.mxu0 0
    %367 = vmatprep.subr.bf16.mxu0 0
    %368 = vmatpush1.bf16.msra.mxu0 0
    %369 = vmatprep.subr.bf16.mxu0 0
    %370 = vmatpush1.bf16.msra.mxu0 0
    %371 = vmatprep.subr.bf16.mxu0 0
    %372 = vmatpush1.bf16.msra.mxu0 0
    %373 = vmatprep.subr.bf16.mxu0 0
    %374 = vmatpush1.bf16.msra.mxu0 0
    %375 = vmatprep.subr.bf16.mxu0 0
    %376 = vmatpush1.bf16.msra.mxu0 0
    %377 = vmatprep.subr.bf16.mxu0 0
    %378 = vmatpush1.bf16.msra.mxu0 0
    %379 = vmatprep.mubr.bf16.mxu0 0
    %380 = vmatmul.mubr.bf16.gmra.mrb[0].mxu0 %v336
    %v381 = vpop.f32.mrb[0].mxu0
    %v382 = vadd.f32 %v320, %v381
    %v383 = vpop.f32.mrb[0].mxu0
    %v384 = vpop.f32.mrb[0].mxu0
    %v385 = vadd.f32 %v320, %v384
    %v386 = vpop.f32.mrb[0].mxu0
    %387 = vmatprep.mubr.bf16.mxu0 0
    %388 = vmatmul.mubr.bf16.gmra.mrb[0].mxu0 %v339
    %v389 = vpop.f32.mrb[0].mxu0
    %v390 = vadd.f32 %v320, %v389
    %v391 = vpop.f32.mrb[0].mxu0
    %v392 = vpop.f32.mrb[0].mxu0
    %v393 = vadd.f32 %v320, %v392
    %v394 = vpop.f32.mrb[0].mxu0
    %395 = vmatprep.mubr.bf16.mxu0 0
    %396 = vmatmul.mubr.bf16.gmra.mrb[0].mxu0 %v342
    %v397 = vpop.f32.mrb[0].mxu0
    %v398 = vadd.f32 %v320, %v397
    %v399 = vpop.f32.mrb[0].mxu0
    %v400 = vpop.f32.mrb[0].mxu0
    %v401 = vadd.f32 %v320, %v400
    %v402 = vpop.f32.mrb[0].mxu0
    %403 = vmatprep.mubr.bf16.mxu0 0
    %404 = vmatmul.mubr.bf16.gmra.mrb[0].mxu0 %v345
    %v405 = vpop.f32.mrb[0].mxu0
    %v406 = vadd.f32 %v320, %v405
    %v407 = vpop.f32.mrb[0].mxu0
    %v408 = vpop.f32.mrb[0].mxu0
    %v409 = vadd.f32 %v320, %v408
    %v410 = vpop.f32.mrb[0].mxu0
    %411 = vdwg.mxu0
    %v412 = vtanh.pop %v382
    %v413 = vtanh.pop %v385
    %v414 = vtanh.pop %v390
    %v415 = vtanh.pop %v393
    %v416 = vtanh.pop %v398
    %v417 = vtanh.pop %v401
    %v418 = vtanh.pop %v406
    %v419 = vtanh.pop %v409
    %v420 = vpack.c.bf16 %v413, %v412
    %v421 = vpack.c.bf16 %v415, %v414
    %v422 = vpack.c.bf16 %v417, %v416
    %v423 = vpack.c.bf16 %v419, %v418
    %v424 = vld [vmem:[%s7] sm:$0xf]
    %v425 = vld [vmem:[%s7 + $0x4] sm:$0xf]
    %v426 = vld [vmem:[%s7 + $0x8] sm:$0xf]
    %v427 = vld [vmem:[%s7 + $0xc] sm:$0xf]
    %v428 = vld [vmem:[%s7 + $0x10] sm:$0xf]
    %v429 = vld [vmem:[%s7 + $0x14] sm:$0xf]
    %v430 = vld [vmem:[%s7 + $0x18] sm:$0xf]
    %v431 = vld [vmem:[%s7 + $0x1c] sm:$0xf]
    %v432 = vld [vmem:[%s8] sm:$0x1]
    %v434 = vlaneseq
    %v435 = vshrl.u32 %v434, 7
    %v436 = vsub.s32 0, %v435
    %v437 = vrot.slane %v432, %v436
    %v447 = vunpack.c.l.b16 %v424
    %v448 = vunpack.c.l.b16 %v425
    %v449 = vunpack.c.l.b16 %v426
    %v450 = vunpack.c.l.b16 %v427
    %v451 = vunpack.c.l.b16 %v428
    %v452 = vunpack.c.l.b16 %v429
    %v453 = vunpack.c.l.b16 %v430
    %v454 = vunpack.c.l.b16 %v431
    %v455 = vpack.c.b16 %v448, %v447
    %v456 = vpack.c.b16 %v450, %v449
    %v457 = vpack.c.b16 %v452, %v451
    %v458 = vpack.c.b16 %v454, %v453
    %v464 = vsel %vm229, %v420, 0
    %v467 = vsel %vm229, %v421, 0
    %v470 = vsel %vm229, %v422, 0
    %v473 = vsel %vm229, %v423, 0
    %475 = vmatprep.subr.bf16.mxu0 0
    %476 = vmatpush1.bf16.msra.mxu0 %v455
    %477 = vmatprep.subr.bf16.mxu0 0
    %478 = vmatpush1.bf16.msra.mxu0 %v456
    %479 = vmatprep.subr.bf16.mxu0 0
    %480 = vmatpush1.bf16.msra.mxu0 %v457
    %481 = vmatprep.subr.bf16.mxu0 0
    %482 = vmatpush1.bf16.msra.mxu0 %v458
    %483 = vmatprep.subr.bf16.mxu0 0
    %484 = vmatpush1.bf16.msra.mxu0 0
    %485 = vmatprep.subr.bf16.mxu0 0
    %486 = vmatpush1.bf16.msra.mxu0 0
    %487 = vmatprep.subr.bf16.mxu0 0
    %488 = vmatpush1.bf16.msra.mxu0 0
    %489 = vmatprep.subr.bf16.mxu0 0
    %490 = vmatpush1.bf16.msra.mxu0 0
    %491 = vmatprep.subr.bf16.mxu0 0
    %492 = vmatpush1.bf16.msra.mxu0 0
    %493 = vmatprep.subr.bf16.mxu0 0
    %494 = vmatpush1.bf16.msra.mxu0 0
    %495 = vmatprep.subr.bf16.mxu0 0
    %496 = vmatpush1.bf16.msra.mxu0 0
    %497 = vmatprep.subr.bf16.mxu0 0
    %498 = vmatpush1.bf16.msra.mxu0 0
    %499 = vmatprep.subr.bf16.mxu0 0
    %500 = vmatpush1.bf16.msra.mxu0 0
    %501 = vmatprep.subr.bf16.mxu0 0
    %502 = vmatpush1.bf16.msra.mxu0 0
    %503 = vmatprep.subr.bf16.mxu0 0
    %504 = vmatpush1.bf16.msra.mxu0 0
    %505 = vmatprep.subr.bf16.mxu0 0
    %506 = vmatpush1.bf16.msra.mxu0 0
    %507 = vmatprep.mubr.bf16.mxu0 0
    %508 = vmatmul.mubr.bf16.gmra.mrb[0].mxu0 %v464
    %v509 = vpop.f32.mrb[0].mxu0
    %v510 = vadd.f32 %v437, %v509
    %v511 = vpop.f32.mrb[0].mxu0
    %v512 = vpop.f32.mrb[0].mxu0
    %v513 = vadd.f32 %v437, %v512
    %v514 = vpop.f32.mrb[0].mxu0
    %515 = vmatprep.mubr.bf16.mxu0 0
    %516 = vmatmul.mubr.bf16.gmra.mrb[0].mxu0 %v467
    %v517 = vpop.f32.mrb[0].mxu0
    %v518 = vadd.f32 %v437, %v517
    %v519 = vpop.f32.mrb[0].mxu0
    %v520 = vpop.f32.mrb[0].mxu0
    %v521 = vadd.f32 %v437, %v520
    %v522 = vpop.f32.mrb[0].mxu0
    %523 = vmatprep.mubr.bf16.mxu0 0
    %524 = vmatmul.mubr.bf16.gmra.mrb[0].mxu0 %v470
    %v525 = vpop.f32.mrb[0].mxu0
    %v526 = vadd.f32 %v437, %v525
    %v527 = vpop.f32.mrb[0].mxu0
    %v528 = vpop.f32.mrb[0].mxu0
    %v529 = vadd.f32 %v437, %v528
    %v530 = vpop.f32.mrb[0].mxu0
    %531 = vmatprep.mubr.bf16.mxu0 0
    %532 = vmatmul.mubr.bf16.gmra.mrb[0].mxu0 %v473
    %v533 = vpop.f32.mrb[0].mxu0
    %v534 = vadd.f32 %v437, %v533
    %v535 = vpop.f32.mrb[0].mxu0
    %v536 = vpop.f32.mrb[0].mxu0
    %v537 = vadd.f32 %v437, %v536
    %v538 = vpop.f32.mrb[0].mxu0
    %539 = vdwg.mxu0
    %v540 = vlaneseq
    %v541 = vand.u32 %v540, 127
    %vm542 = vcmp.lt.s32.totalorder %v541, 4
    %v543 = vmul.f32 %v510, 1.442695
    %v544 = vpow.pop %v543
    %v545 = vmul.f32 %v513, 1.442695
    %v546 = vpow.pop %v545
    %v547 = vmul.f32 %v518, 1.442695
    %v548 = vpow.pop %v547
    %v549 = vmul.f32 %v521, 1.442695
    %v550 = vpow.pop %v549
    %v551 = vmul.f32 %v526, 1.442695
    %v552 = vpow.pop %v551
    %v553 = vmul.f32 %v529, 1.442695
    %v554 = vpow.pop %v553
    %v555 = vmul.f32 %v534, 1.442695
    %v556 = vpow.pop %v555
    %v557 = vmul.f32 %v537, 1.442695
    %v558 = vpow.pop %v557
    %v559 = vadd.f32 %v544, 1e-06
    %v560 = vadd.f32 %v546, 1e-06
    %v561 = vadd.f32 %v548, 1e-06
    %v562 = vadd.f32 %v550, 1e-06
    %v563 = vadd.f32 %v552, 1e-06
    %v564 = vadd.f32 %v554, 1e-06
    %v565 = vadd.f32 %v556, 1e-06
    %v566 = vadd.f32 %v558, 1e-06
    %v567 = vsel %vm542, %v510, %v559
    %v568 = vsel %vm542, %v513, %v560
    %v569 = vsel %vm542, %v518, %v561
    %v570 = vsel %vm542, %v521, %v562
    %v571 = vsel %vm542, %v526, %v563
    %v572 = vsel %vm542, %v529, %v564
    %v573 = vsel %vm542, %v534, %v565
    %v574 = vsel %vm542, %v537, %v566
    %vm575 = vcmask 64512
    %576 = vst.msk [vmem:[%s9] sm:$0xff] %vm575, %v567
    %577 = vst.msk [vmem:[%s9 + $0x8] sm:$0xff] %vm575, %v568
    %578 = vst.msk [vmem:[%s9 + $0x10] sm:$0xff] %vm575, %v569
    %579 = vst.msk [vmem:[%s9 + $0x18] sm:$0xff] %vm575, %v570
    %580 = vst.msk [vmem:[%s9 + $0x20] sm:$0xff] %vm575, %v571
    %581 = vst.msk [vmem:[%s9 + $0x28] sm:$0xff] %vm575, %v572
    %582 = vst.msk [vmem:[%s9 + $0x30] sm:$0xff] %vm575, %v573
    %583 = vst.msk [vmem:[%s9 + $0x38] sm:$0xff] %vm575, %v574
    // Predicated region
    $region46: #{_lambda_.1} parent=1 // pred_check
      _
    $region47: #{_lambda_.1} parent=1 // pred_check_branch
      %585 = sbr.rel (0) target = $region49
    $region48: #{_lambda_.1} parent=1 // pred_region
      _
    $region49: #{_lambda_.1} parent=1 // pred_fallthru
      _
    // Predicated region
    $region50: #{_lambda_.1} parent=1 // pred_check
      _
    $region51: #{_lambda_.1} parent=1 // pred_check_branch
      %587 = sbr.rel (0) target = $region53
    $region52: #{_lambda_.1} parent=1 // pred_region
      _
    $region53: #{_lambda_.1} parent=1 // pred_fallthru
      _
    %588 = vsyncpa [#allocation3], 1
    %589 = vsyncpa [#allocation5], 1

</llo_original>
